<compile_context>
chip_gen: v7x
topology: tpu7x:2x2x1
jax: 0.10.0
libtpu: 0.0.40
codegen_flags: <defaults>
</compile_context>

<pallas_src>
import functools

import jax
import jax.numpy as jnp
from jax.experimental import pallas as pl
from jax.experimental.pallas import tpu as pltpu


def _round_up(n, m):
    return ((n + m - 1) // m) * m


def _mlp_kernel(x_ref, w0_ref, b0_ref, w1_ref, b1_ref, wo_ref, bo_ref, o_ref):
    """Fused 3-matmul MLP tile: relu(x@W0+b0) -> relu(.@W1+b1) -> .@Wo+bo."""
    x = x_ref[...]                                           # (TM, Din_p) bf16

    # in_layer + ReLU (bf16 MXU, f32 accumulate, f32 bias/ReLU)
    h = jnp.dot(x, w0_ref[...], preferred_element_type=jnp.float32) + b0_ref[...]
    h = jnp.maximum(h, 0.0)

    # layers[0] (even index -> applied) + ReLU.  layers[1] (odd index) is skipped
    # by the reference forward, so its weights never enter the kernel.
    h = jnp.dot(h.astype(jnp.bfloat16), w1_ref[...],
                preferred_element_type=jnp.float32) + b1_ref[...]
    h = jnp.maximum(h, 0.0)

    # out_layer (no non-linearity)
    o = jnp.dot(h.astype(jnp.bfloat16), wo_ref[...],
                preferred_element_type=jnp.float32) + bo_ref[...]
    o_ref[...] = o.astype(o_ref.dtype)


@functools.partial(jax.jit, static_argnames=("tm",))
def mlp_forward(x, w0, b0, w1, b1, wo, bo, *, tm=256):
    batch, in_dim = x.shape
    h0 = w0.shape[1]
    h1 = w1.shape[1]
    out_dim = wo.shape[1]

    LANE = 128
    din_p = _round_up(in_dim, LANE)
    h0_p = _round_up(h0, LANE)
    h1_p = _round_up(h1, LANE)
    dout_p = _round_up(out_dim, LANE)

    # Batch tile: multiple of 8 sublanes, no bigger than the (padded) batch.
    tm_eff = min(tm, _round_up(batch, 8))
    b_p = _round_up(batch, tm_eff)

    # Zero-pad to lane/sublane-dense shapes; cast matmul operands to bf16.
    x_p = jnp.pad(x, ((0, b_p - batch), (0, din_p - in_dim))).astype(jnp.bfloat16)
    w0_p = jnp.pad(w0, ((0, din_p - in_dim), (0, h0_p - h0))).astype(jnp.bfloat16)
    b0_p = jnp.pad(b0, ((0, 0), (0, h0_p - h0))).astype(jnp.float32)
    w1_p = jnp.pad(w1, ((0, h0_p - h0), (0, h1_p - h1))).astype(jnp.bfloat16)
    b1_p = jnp.pad(b1, ((0, 0), (0, h1_p - h1))).astype(jnp.float32)
    wo_p = jnp.pad(wo, ((0, h1_p - h1), (0, dout_p - out_dim))).astype(jnp.bfloat16)
    bo_p = jnp.pad(bo, ((0, 0), (0, dout_p - out_dim))).astype(jnp.float32)

    grid = (pl.cdiv(b_p, tm_eff),)

    flops = 2 * b_p * (din_p * h0_p + h0_p * h1_p + h1_p * dout_p)
    bytes_accessed = (
        x_p.size * 2 + w0_p.size * 2 + w1_p.size * 2 + wo_p.size * 2
        + b0_p.size * 4 + b1_p.size * 4 + bo_p.size * 4
        + b_p * dout_p * 4
    )

    out_p = pl.pallas_call(
        _mlp_kernel,
        out_shape=jax.ShapeDtypeStruct((b_p, dout_p), jnp.float32),
        grid_spec=pltpu.PrefetchScalarGridSpec(
            num_scalar_prefetch=0,
            grid=grid,
            in_specs=[
                # Activations: tiled over batch -> double-buffered / pipelined.
                pl.BlockSpec((tm_eff, din_p), lambda i: (i, 0)),
                # Weights & biases: block index constant -> fetched once, VMEM-resident.
                pl.BlockSpec((din_p, h0_p), lambda i: (0, 0)),
                pl.BlockSpec((1, h0_p), lambda i: (0, 0)),
                pl.BlockSpec((h0_p, h1_p), lambda i: (0, 0)),
                pl.BlockSpec((1, h1_p), lambda i: (0, 0)),
                pl.BlockSpec((h1_p, dout_p), lambda i: (0, 0)),
                pl.BlockSpec((1, dout_p), lambda i: (0, 0)),
            ],
            out_specs=pl.BlockSpec((tm_eff, dout_p), lambda i: (i, 0)),
        ),
        compiler_params=pltpu.CompilerParams(
            dimension_semantics=("parallel",),   # megacore sharding on v7x; no-op v5e/v6e
            vmem_limit_bytes=48 << 20,           # safe under v7x's 64 MiB per-TC VMEM
        ),
        cost_estimate=pl.CostEstimate(
            flops=flops, transcendentals=0, bytes_accessed=bytes_accessed),
    )(x_p, w0_p, b0_p, w1_p, b1_p, wo_p, bo_p)

    # Strip padding back to the logical shape.
    return out_p[:batch, :out_dim]


def mlp_reference(x, w0, b0, w1, b1, wo, bo):
    h = jnp.maximum(x @ w0 + b0, 0.0)
    h = jnp.maximum(h @ w1 + b1, 0.0)   # layers[0] applied; layers[1] skipped
    return h @ wo + bo


if __name__ == "__main__":
    # Module hyperparameters (small; sizes all equal so skipping odd-indexed
    # hidden layers keeps shapes valid, matching the reference forward).
    batch = 256
    in_dim = 16
    sizes = [32, 32, 32]   # layers = [Linear(32,32) idx0 (applied), Linear(32,32) idx1 (skipped)]
    out_dim = 8

    key = jax.random.PRNGKey(0)
    ks = jax.random.split(key, 8)

    # Deterministic synthetic parameters (stored as (in, out) == torch weight.T).
    w_in = jax.random.normal(ks[0], (in_dim, sizes[0]), jnp.float32) * 0.1
    b_in = jax.random.normal(ks[1], (1, sizes[0]), jnp.float32) * 0.1
    w_l0 = jax.random.normal(ks[2], (sizes[0], sizes[1]), jnp.float32) * 0.1
    b_l0 = jax.random.normal(ks[3], (1, sizes[1]), jnp.float32) * 0.1
    # layers[1] (odd index) exists in the module but is never used in forward.
    w_out = jax.random.normal(ks[4], (sizes[-1], out_dim), jnp.float32) * 0.1
    b_out = jax.random.normal(ks[5], (1, out_dim), jnp.float32) * 0.1

    x = jax.random.normal(ks[6], (batch, in_dim), jnp.float32)

    y = mlp_forward(x, w_in, b_in, w_l0, b_l0, w_out, b_out, tm=64)  # grid = (4,)
    y = jax.block_until_ready(y)

    y_ref = mlp_reference(x, w_in, b_in, w_l0, b_l0, w_out, b_out)
    assert y.shape == (batch, out_dim)
    # bf16 MXU operands with f32 accumulation -> loose tolerance vs f32 reference.
    assert jnp.allclose(y, y_ref, atol=2e-2, rtol=2e-2), "mismatch vs reference"

    print("KERNEL_OK")
</pallas_src>

<mosaic_0001>
module attributes {stable_mosaic.version = 11 : i64} {
  func.func @_mlp_kernel(%arg0: i32, %arg1: memref<64x128xbf16, #tpu.memory_space<vmem>>, %arg2: memref<128x128xbf16, #tpu.memory_space<vmem>>, %arg3: memref<1x128xf32, #tpu.memory_space<vmem>>, %arg4: memref<128x128xbf16, #tpu.memory_space<vmem>>, %arg5: memref<1x128xf32, #tpu.memory_space<vmem>>, %arg6: memref<128x128xbf16, #tpu.memory_space<vmem>>, %arg7: memref<1x128xf32, #tpu.memory_space<vmem>>, %arg8: memref<64x128xf32, #tpu.memory_space<vmem>>) attributes {dimension_semantics = [#tpu.dimension_semantics<parallel>], iteration_bounds = array<i64: 4>, scalar_prefetch = 0 : i64, scratch_operands = 0 : i64, tpu.core_type = #tpu.core_type<tc>, window_params = [{transform_indices = @transform_0, window_bounds = array<i64: 64, 128>}, {pipeline_mode = #tpu.pipeline_mode<synchronous>, transform_indices = @transform_1, window_bounds = array<i64: 128, 128>}, {pipeline_mode = #tpu.pipeline_mode<synchronous>, transform_indices = @transform_2, window_bounds = array<i64: 1, 128>}, {pipeline_mode = #tpu.pipeline_mode<synchronous>, transform_indices = @transform_3, window_bounds = array<i64: 128, 128>}, {pipeline_mode = #tpu.pipeline_mode<synchronous>, transform_indices = @transform_4, window_bounds = array<i64: 1, 128>}, {pipeline_mode = #tpu.pipeline_mode<synchronous>, transform_indices = @transform_5, window_bounds = array<i64: 128, 128>}, {pipeline_mode = #tpu.pipeline_mode<synchronous>, transform_indices = @transform_6, window_bounds = array<i64: 1, 128>}, {transform_indices = @transform_7, window_bounds = array<i64: 64, 128>}]} {
    %c0 = arith.constant 0 : index
    %c0_0 = arith.constant 0 : index
    %0 = vector.load %arg1[%c0, %c0_0] : memref<64x128xbf16, #tpu.memory_space<vmem>>, vector<64x128xbf16>
    %c0_1 = arith.constant 0 : index
    %c0_2 = arith.constant 0 : index
    %1 = vector.load %arg2[%c0_1, %c0_2] : memref<128x128xbf16, #tpu.memory_space<vmem>>, vector<128x128xbf16>
    %cst = arith.constant dense<0.000000e+00> : vector<64x128xf32>
    %2 = tpu.matmul %0, %1, %cst {dimension_numbers = #tpu.dot_dimension_numbers<[1], [0], [0], [1], [0, 0, 1, 1], [], []>} : vector<64x128xbf16>, vector<128x128xbf16>, vector<64x128xf32> -> vector<64x128xf32>
    %c0_3 = arith.constant 0 : index
    %c0_4 = arith.constant 0 : index
    %3 = vector.load %arg3[%c0_3, %c0_4] : memref<1x128xf32, #tpu.memory_space<vmem>>, vector<1x128xf32>
    %4 = vector.broadcast %3 : vector<1x128xf32> to vector<64x128xf32>
    %5 = arith.addf %2, %4 : vector<64x128xf32>
    %cst_5 = arith.constant 0.000000e+00 : f32
    %6 = vector.broadcast %cst_5 : f32 to vector<64x128xf32>
    %7 = arith.maximumf %5, %6 : vector<64x128xf32>
    %8 = arith.truncf %7 : vector<64x128xf32> to vector<64x128xbf16>
    %c0_6 = arith.constant 0 : index
    %c0_7 = arith.constant 0 : index
    %9 = vector.load %arg4[%c0_6, %c0_7] : memref<128x128xbf16, #tpu.memory_space<vmem>>, vector<128x128xbf16>
    %cst_8 = arith.constant dense<0.000000e+00> : vector<64x128xf32>
    %10 = tpu.matmul %8, %9, %cst_8 {dimension_numbers = #tpu.dot_dimension_numbers<[1], [0], [0], [1], [0, 0, 1, 1], [], []>} : vector<64x128xbf16>, vector<128x128xbf16>, vector<64x128xf32> -> vector<64x128xf32>
    %c0_9 = arith.constant 0 : index
    %c0_10 = arith.constant 0 : index
    %11 = vector.load %arg5[%c0_9, %c0_10] : memref<1x128xf32, #tpu.memory_space<vmem>>, vector<1x128xf32>
    %12 = vector.broadcast %11 : vector<1x128xf32> to vector<64x128xf32>
    %13 = arith.addf %10, %12 : vector<64x128xf32>
    %cst_11 = arith.constant 0.000000e+00 : f32
    %14 = vector.broadcast %cst_11 : f32 to vector<64x128xf32>
    %15 = arith.maximumf %13, %14 : vector<64x128xf32>
    %16 = arith.truncf %15 : vector<64x128xf32> to vector<64x128xbf16>
    %c0_12 = arith.constant 0 : index
    %c0_13 = arith.constant 0 : index
    %17 = vector.load %arg6[%c0_12, %c0_13] : memref<128x128xbf16, #tpu.memory_space<vmem>>, vector<128x128xbf16>
    %cst_14 = arith.constant dense<0.000000e+00> : vector<64x128xf32>
    %18 = tpu.matmul %16, %17, %cst_14 {dimension_numbers = #tpu.dot_dimension_numbers<[1], [0], [0], [1], [0, 0, 1, 1], [], []>} : vector<64x128xbf16>, vector<128x128xbf16>, vector<64x128xf32> -> vector<64x128xf32>
    %c0_15 = arith.constant 0 : index
    %c0_16 = arith.constant 0 : index
    %19 = vector.load %arg7[%c0_15, %c0_16] : memref<1x128xf32, #tpu.memory_space<vmem>>, vector<1x128xf32>
    %20 = vector.broadcast %19 : vector<1x128xf32> to vector<64x128xf32>
    %21 = arith.addf %18, %20 : vector<64x128xf32>
    %c0_17 = arith.constant 0 : index
    %c0_18 = arith.constant 0 : index
    %22 = vector.load %arg8[%c0_17, %c0_18] : memref<64x128xf32, #tpu.memory_space<vmem>>, vector<64x128xf32>
    tpu.vector_store %arg8[%c0_17, %c0_18], %21 {strides = array<i32>} : memref<64x128xf32, #tpu.memory_space<vmem>>, vector<64x128xf32>,
    return
  }
  func.func @transform_0(%arg0: i32) -> (i32, i32) {
    %c0_i32 = arith.constant 0 : i32
    %c0_i32_0 = arith.constant 0 : i32
    return %arg0, %c0_i32 : i32, i32
  }
  func.func @transform_1(%arg0: i32) -> (i32, i32) {
    %c0_i32 = arith.constant 0 : i32
    %c0_i32_0 = arith.constant 0 : i32
    %c0_i32_1 = arith.constant 0 : i32
    return %c0_i32, %c0_i32_0 : i32, i32
  }
  func.func @transform_2(%arg0: i32) -> (i32, i32) {
    %c0_i32 = arith.constant 0 : i32
    %c0_i32_0 = arith.constant 0 : i32
    %c0_i32_1 = arith.constant 0 : i32
    return %c0_i32, %c0_i32_0 : i32, i32
  }
  func.func @transform_3(%arg0: i32) -> (i32, i32) {
    %c0_i32 = arith.constant 0 : i32
    %c0_i32_0 = arith.constant 0 : i32
    %c0_i32_1 = arith.constant 0 : i32
    return %c0_i32, %c0_i32_0 : i32, i32
  }
  func.func @transform_4(%arg0: i32) -> (i32, i32) {
    %c0_i32 = arith.constant 0 : i32
    %c0_i32_0 = arith.constant 0 : i32
    %c0_i32_1 = arith.constant 0 : i32
    return %c0_i32, %c0_i32_0 : i32, i32
  }
  func.func @transform_5(%arg0: i32) -> (i32, i32) {
    %c0_i32 = arith.constant 0 : i32
    %c0_i32_0 = arith.constant 0 : i32
    %c0_i32_1 = arith.constant 0 : i32
    return %c0_i32, %c0_i32_0 : i32, i32
  }
  func.func @transform_6(%arg0: i32) -> (i32, i32) {
    %c0_i32 = arith.constant 0 : i32
    %c0_i32_0 = arith.constant 0 : i32
    %c0_i32_1 = arith.constant 0 : i32
    return %c0_i32, %c0_i32_0 : i32, i32
  }
  func.func @transform_7(%arg0: i32) -> (i32, i32) {
    %c0_i32 = arith.constant 0 : i32
    %c0_i32_0 = arith.constant 0 : i32
    return %arg0, %c0_i32 : i32, i32
  }
}

</mosaic_0001>

<llo_original>
// kernel: mlp_forward.1
$region0: #{mlp_forward.1}
  #allocation0 [shape = 'u32[]', space=smem, size = 0x4, offset = 0x4, fixed_abs, tag = 'smem constant byte address 0x4 - core index']
  #allocation1 [shape = 'u32[144,128]{1,0:T(1,128)}', space=vmem, size = 0x12000, scoped, tag = 'internal scratch']
  %s0 = inlined_call_operand.vmem [shape: bf16[256,128], index: 0, kind: input, shape index: {}]
  %s1 = inlined_call_operand.vmem [shape: bf16[128,128], index: 1, kind: input, shape index: {}]
  %s2 = inlined_call_operand.vmem [shape: f32[1,128], index: 2, kind: input, shape index: {}]
  %s3 = inlined_call_operand.vmem [shape: bf16[128,128], index: 3, kind: input, shape index: {}]
  %s4 = inlined_call_operand.vmem [shape: f32[1,128], index: 4, kind: input, shape index: {}]
  %s5 = inlined_call_operand.vmem [shape: bf16[128,128], index: 5, kind: input, shape index: {}]
  %s6 = inlined_call_operand.vmem [shape: f32[1,128], index: 6, kind: input, shape index: {}]
  %s7 = inlined_call_operand.vmem [shape: f32[256,128], index: 7, kind: output, shape index: {}]
  %s8 = sld [smem:[#allocation0]]
  $region61: #{mlp_forward.1} parent=0
    _
  %s10 = ssub.s32 1, %s8
  %s11 = scalar_select 0, %s10, %s8
  loop: start=0, step=1, limit=6
  $region2: #{mlp_forward.1} parent=0 // loop_pre_header
    _
  $region3: #{mlp_forward.1} parent=0 // loop_header
    %s13 = sphi 0, %s17
    %p14 = scmp.ge.s32.totalorder %s13, 6
    %s23 = sphi 0, %s25
    %s26 = sphi 0, %s23
    %s27 = sphi 0, %s26
    %s43 = sphi 0, %s27
    %s47 = sphi 0, %s47
    %s49 = sphi 0, %s47
    %s50 = sphi 0, %s49
    %s64 = sphi 0, %s50
    %s68 = sphi 0, %s68
    %s70 = sphi 0, %s68
    %s71 = sphi 0, %s70
    %s85 = sphi 0, %s71
    %s89 = sphi 0, %s89
    %s91 = sphi 0, %s89
    %s92 = sphi 0, %s91
    %s106 = sphi 0, %s92
    %s110 = sphi 0, %s110
    %s112 = sphi 0, %s110
    %s113 = sphi 0, %s112
    %s127 = sphi 0, %s113
    %s131 = sphi 0, %s131
    %s133 = sphi 0, %s131
    %s134 = sphi 0, %s133
    %s148 = sphi 0, %s134
    %s152 = sphi 0, %s152
    %s154 = sphi 0, %s152
    %s155 = sphi 0, %s154
    %s169 = sphi 0, %s155
    %s175 = sphi 0, %s177
    %s178 = sphi 0, %s175
    %s179 = sphi 0, %s178
    %s195 = sphi 0, %s179
  $region4: #{mlp_forward.1} parent=0 // loop_header_branch
    %16 = sbr.rel (%p14) target = $region8
  $region5: #{mlp_forward.1} parent=0 // loop_body
    %s18 = ssub.s32 %s13, 1
    %s19 = ssub.s32 %s13, 2
    %s20 = sadd.s32 %s13, 1
    %s21 = ssub.s32 %s13, %s20
    %p22 = scmp.eq.s32.totalorder %s21, 0
    %s24 = sadd.s32 %s23, 1
    %s25 = scalar_select %p22, %s23, %s24
    %p28 = pneg %p22
    %p29 = scmp.eq.s32.totalorder %s13, 3
    %p30 = por %p28, %p29
    %p31 = scmp.ne.s32.totalorder %s23, %s26
    %p32 = scmp.eq.s32.totalorder %s13, 0
    %p33 = por %p31, %p32
    %p34 = scmp.ne.s32.totalorder %s23, %s26
    %p35 = scmp.eq.s32.totalorder %s18, 3
    %p36 = por %p34, %p35
    %p37 = scmp.ne.s32.totalorder %s26, %s27
    %p38 = scmp.eq.s32.totalorder %s18, 0
    %p39 = por %p37, %p38
    %p40 = scmp.ne.s32.totalorder %s26, %s27
    %p41 = scmp.eq.s32.totalorder %s19, 3
    %p42 = por %p40, %p41
    %p44 = scmp.ne.s32.totalorder %s27, %s43
    %p45 = scmp.eq.s32.totalorder %s19, 0
    %p46 = por %p44, %p45
    %s48 = sadd.s32 %s47, 1
    %p51 = scmp.eq.s32.totalorder %s13, 3
    %p52 = scmp.ne.s32.totalorder %s47, %s49
    %p53 = scmp.eq.s32.totalorder %s13, 0
    %p54 = por %p52, %p53
    %p55 = scmp.ne.s32.totalorder %s47, %s49
    %p56 = scmp.eq.s32.totalorder %s18, 3
    %p57 = por %p55, %p56
    %p58 = scmp.ne.s32.totalorder %s49, %s50
    %p59 = scmp.eq.s32.totalorder %s18, 0
    %p60 = por %p58, %p59
    %p61 = scmp.ne.s32.totalorder %s49, %s50
    %p62 = scmp.eq.s32.totalorder %s19, 3
    %p63 = por %p61, %p62
    %p65 = scmp.ne.s32.totalorder %s50, %s64
    %p66 = scmp.eq.s32.totalorder %s19, 0
    %p67 = por %p65, %p66
    %s69 = sadd.s32 %s68, 1
    %p72 = scmp.eq.s32.totalorder %s13, 3
    %p73 = scmp.ne.s32.totalorder %s68, %s70
    %p74 = scmp.eq.s32.totalorder %s13, 0
    %p75 = por %p73, %p74
    %p76 = scmp.ne.s32.totalorder %s68, %s70
    %p77 = scmp.eq.s32.totalorder %s18, 3
    %p78 = por %p76, %p77
    %p79 = scmp.ne.s32.totalorder %s70, %s71
    %p80 = scmp.eq.s32.totalorder %s18, 0
    %p81 = por %p79, %p80
    %p82 = scmp.ne.s32.totalorder %s70, %s71
    %p83 = scmp.eq.s32.totalorder %s19, 3
    %p84 = por %p82, %p83
    %p86 = scmp.ne.s32.totalorder %s71, %s85
    %p87 = scmp.eq.s32.totalorder %s19, 0
    %p88 = por %p86, %p87
    %s90 = sadd.s32 %s89, 1
    %p93 = scmp.eq.s32.totalorder %s13, 3
    %p94 = scmp.ne.s32.totalorder %s89, %s91
    %p95 = scmp.eq.s32.totalorder %s13, 0
    %p96 = por %p94, %p95
    %p97 = scmp.ne.s32.totalorder %s89, %s91
    %p98 = scmp.eq.s32.totalorder %s18, 3
    %p99 = por %p97, %p98
    %p100 = scmp.ne.s32.totalorder %s91, %s92
    %p101 = scmp.eq.s32.totalorder %s18, 0
    %p102 = por %p100, %p101
    %p103 = scmp.ne.s32.totalorder %s91, %s92
    %p104 = scmp.eq.s32.totalorder %s19, 3
    %p105 = por %p103, %p104
    %p107 = scmp.ne.s32.totalorder %s92, %s106
    %p108 = scmp.eq.s32.totalorder %s19, 0
    %p109 = por %p107, %p108
    %s111 = sadd.s32 %s110, 1
    %p114 = scmp.eq.s32.totalorder %s13, 3
    %p115 = scmp.ne.s32.totalorder %s110, %s112
    %p116 = scmp.eq.s32.totalorder %s13, 0
    %p117 = por %p115, %p116
    %p118 = scmp.ne.s32.totalorder %s110, %s112
    %p119 = scmp.eq.s32.totalorder %s18, 3
    %p120 = por %p118, %p119
    %p121 = scmp.ne.s32.totalorder %s112, %s113
    %p122 = scmp.eq.s32.totalorder %s18, 0
    %p123 = por %p121, %p122
    %p124 = scmp.ne.s32.totalorder %s112, %s113
    %p125 = scmp.eq.s32.totalorder %s19, 3
    %p126 = por %p124, %p125
    %p128 = scmp.ne.s32.totalorder %s113, %s127
    %p129 = scmp.eq.s32.totalorder %s19, 0
    %p130 = por %p128, %p129
    %s132 = sadd.s32 %s131, 1
    %p135 = scmp.eq.s32.totalorder %s13, 3
    %p136 = scmp.ne.s32.totalorder %s131, %s133
    %p137 = scmp.eq.s32.totalorder %s13, 0
    %p138 = por %p136, %p137
    %p139 = scmp.ne.s32.totalorder %s131, %s133
    %p140 = scmp.eq.s32.totalorder %s18, 3
    %p141 = por %p139, %p140
    %p142 = scmp.ne.s32.totalorder %s133, %s134
    %p143 = scmp.eq.s32.totalorder %s18, 0
    %p144 = por %p142, %p143
    %p145 = scmp.ne.s32.totalorder %s133, %s134
    %p146 = scmp.eq.s32.totalorder %s19, 3
    %p147 = por %p145, %p146
    %p149 = scmp.ne.s32.totalorder %s134, %s148
    %p150 = scmp.eq.s32.totalorder %s19, 0
    %p151 = por %p149, %p150
    %s153 = sadd.s32 %s152, 1
    %p156 = scmp.eq.s32.totalorder %s13, 3
    %p157 = scmp.ne.s32.totalorder %s152, %s154
    %p158 = scmp.eq.s32.totalorder %s13, 0
    %p159 = por %p157, %p158
    %p160 = scmp.ne.s32.totalorder %s152, %s154
    %p161 = scmp.eq.s32.totalorder %s18, 3
    %p162 = por %p160, %p161
    %p163 = scmp.ne.s32.totalorder %s154, %s155
    %p164 = scmp.eq.s32.totalorder %s18, 0
    %p165 = por %p163, %p164
    %p166 = scmp.ne.s32.totalorder %s154, %s155
    %p167 = scmp.eq.s32.totalorder %s19, 3
    %p168 = por %p166, %p167
    %p170 = scmp.ne.s32.totalorder %s155, %s169
    %p171 = scmp.eq.s32.totalorder %s19, 0
    %p172 = por %p170, %p171
    %s173 = ssub.s32 %s13, %s20
    %p174 = scmp.eq.s32.totalorder %s173, 0
    %s176 = sadd.s32 %s175, 1
    %s177 = scalar_select %p174, %s175, %s176
    %p180 = pneg %p174
    %p181 = scmp.eq.s32.totalorder %s13, 3
    %p182 = por %p180, %p181
    %p183 = scmp.ne.s32.totalorder %s175, %s178
    %p184 = scmp.eq.s32.totalorder %s13, 0
    %p185 = por %p183, %p184
    %p186 = scmp.ne.s32.totalorder %s175, %s178
    %p187 = scmp.eq.s32.totalorder %s18, 3
    %p188 = por %p186, %p187
    %p189 = scmp.ne.s32.totalorder %s178, %s179
    %p190 = scmp.eq.s32.totalorder %s18, 0
    %p191 = por %p189, %p190
    %p192 = scmp.ne.s32.totalorder %s178, %s179
    %p193 = scmp.eq.s32.totalorder %s19, 3
    %p194 = por %p192, %p193
    %p196 = scmp.ne.s32.totalorder %s179, %s195
    %p197 = scmp.eq.s32.totalorder %s19, 0
    %p198 = por %p196, %p197
    %p199 = scmp.le.s32.totalorder 1, %s13
    %p200 = scmp.lt.s32.totalorder %s13, 5
    %p201 = pnand %p199, %p200
    %p202 = pneg %p201
    // Predicated region
    $region9: #{mlp_forward.1} parent=5 // pred_check
      _
    $region10: #{mlp_forward.1} parent=5 // pred_check_branch
      %204 = sbr.rel (%p201) target = $region12
    $region11: #{mlp_forward.1} parent=5 // pred_region
      %s205 = ssub.s32 %s13, 1
      // Predicated region
      $region13: #{mlp_forward.1} parent=11 // pred_check
        %p206 = pneg %p60
      $region14: #{mlp_forward.1} parent=11 // pred_check_branch
        %208 = sbr.rel (%p206) target = $region16
      $region15: #{mlp_forward.1} parent=11 // pred_region
        _
      $region16: #{mlp_forward.1} parent=11 // pred_fallthru
        _
      // Predicated region
      $region17: #{mlp_forward.1} parent=11 // pred_check
        %p209 = pneg %p81
      $region18: #{mlp_forward.1} parent=11 // pred_check_branch
        %211 = sbr.rel (%p209) target = $region20
      $region19: #{mlp_forward.1} parent=11 // pred_region
        _
      $region20: #{mlp_forward.1} parent=11 // pred_fallthru
        _
      // Predicated region
      $region21: #{mlp_forward.1} parent=11 // pred_check
        %p212 = pneg %p102
      $region22: #{mlp_forward.1} parent=11 // pred_check_branch
        %214 = sbr.rel (%p212) target = $region24
      $region23: #{mlp_forward.1} parent=11 // pred_region
        _
      $region24: #{mlp_forward.1} parent=11 // pred_fallthru
        _
      // Predicated region
      $region25: #{mlp_forward.1} parent=11 // pred_check
        %p215 = pneg %p123
      $region26: #{mlp_forward.1} parent=11 // pred_check_branch
        %217 = sbr.rel (%p215) target = $region28
      $region27: #{mlp_forward.1} parent=11 // pred_region
        _
      $region28: #{mlp_forward.1} parent=11 // pred_fallthru
        _
      // Predicated region
      $region29: #{mlp_forward.1} parent=11 // pred_check
        %p218 = pneg %p144
      $region30: #{mlp_forward.1} parent=11 // pred_check_branch
        %220 = sbr.rel (%p218) target = $region32
      $region31: #{mlp_forward.1} parent=11 // pred_region
        _
      $region32: #{mlp_forward.1} parent=11 // pred_fallthru
        _
      // Predicated region
      $region33: #{mlp_forward.1} parent=11 // pred_check
        %p221 = pneg %p165
      $region34: #{mlp_forward.1} parent=11 // pred_check_branch
        %223 = sbr.rel (%p221) target = $region36
      $region35: #{mlp_forward.1} parent=11 // pred_region
        _
      $region36: #{mlp_forward.1} parent=11 // pred_fallthru
        _
    $region12: #{mlp_forward.1} parent=5 // pred_fallthru
      _
    %p224 = scmp.lt.s32.totalorder %s13, 4
    // Predicated region
    $region37: #{mlp_forward.1} parent=5 // pred_check
      %p225 = pneg %p224
    $region38: #{mlp_forward.1} parent=5 // pred_check_branch
      %227 = sbr.rel (%p225) target = $region40
    $region39: #{mlp_forward.1} parent=5 // pred_region
      // Predicated region
      $region41: #{mlp_forward.1} parent=39 // pred_check
        %p228 = pneg %p33
      $region42: #{mlp_forward.1} parent=39 // pred_check_branch
        %230 = sbr.rel (%p228) target = $region44
      $region43: #{mlp_forward.1} parent=39 // pred_region
        %s231 = smul.u32 8, %s13
        %p232 = scmp.lt.s32.totalorder %s231, 31
        %s233 = scalar_select %p232, %s231, 31
        %s234 = smul.addr %s233, 4
        %s235 = scalar_lea.vmem %s0, %s234
        %s236 = smul.u32 8, %s13
      $region44: #{mlp_forward.1} parent=39 // pred_fallthru
        _
    $region40: #{mlp_forward.1} parent=5 // pred_fallthru
      _
    %p237 = scmp.le.s32.totalorder 1, %s13
    %p238 = scmp.lt.s32.totalorder %s13, 5
    %p239 = pnand %p237, %p238
    %p240 = pneg %p239
    // Predicated region
    $region45: #{mlp_forward.1} parent=5 // pred_check
      _
    $region46: #{mlp_forward.1} parent=5 // pred_check_branch
      %242 = sbr.rel (%p239) target = $region48
    $region47: #{mlp_forward.1} parent=5 // pred_region
      %s243 = ssub.s32 %s13, 1
      %s244 = smul.u32 8, %s18
      %p245 = scmp.lt.s32.totalorder %s244, 31
      %s246 = scalar_select %p245, %s244, 31
      %s247 = smul.addr %s246, 4
      %s248 = scalar_lea.vmem %s0, %s247
      %p249 = pneg %p39
      %p250 = pneg %p36
      %p251 = pneg %p60
      %p252 = pneg %p57
      %p253 = pneg %p81
      %p254 = pneg %p78
      %p255 = pneg %p102
      %p256 = pneg %p99
      %p257 = pneg %p123
      %p258 = pneg %p120
      %p259 = pneg %p144
      %p260 = pneg %p141
      %p261 = pneg %p165
      %p262 = pneg %p162
      %p263 = pneg %p191
      %p264 = pneg %p188
      %s265 = smul.u32 8, %s18
      %p266 = scmp.lt.s32.totalorder %s265, 31
      %s267 = scalar_select %p266, %s265, 31
      %s268 = smul.addr %s267, 8
      %s269 = scalar_lea.vmem %s7, %s268
      %s270 = smul.u32 8, %s18
      %p271 = scmp.lt.s32.totalorder %s270, 31
      %s272 = scalar_select %p271, %s270, 31
      %s273 = smul.addr %s272, 4
      %s274 = scalar_lea.vmem %s0, %s273
      %s275 = smul.u32 8, %s18
      %s276 = smul.u32 8, %s18
      %p277 = scmp.lt.s32.totalorder %s276, 31
      %s278 = scalar_select %p277, %s276, 31
      %s279 = smul.addr %s278, 8
      %s280 = scalar_lea.vmem %s7, %s279
      %s281 = smul.u32 8, %s18
      %v283 = vld [vmem:[%s274] sm:$0xf]
      %v284 = vld [vmem:[%s274 + $0x4] sm:$0xf]
      %v285 = vld [vmem:[%s274 + $0x8] sm:$0xf]
      %v286 = vld [vmem:[%s274 + $0xc] sm:$0xf]
      %v287 = vld [vmem:[%s274 + $0x10] sm:$0xf]
      %v288 = vld [vmem:[%s274 + $0x14] sm:$0xf]
      %v289 = vld [vmem:[%s274 + $0x18] sm:$0xf]
      %v290 = vld [vmem:[%s274 + $0x1c] sm:$0xf]
      %v291 = vld [vmem:[%s1] sm:$0xf]
      %v292 = vld [vmem:[%s1 + $0x4] sm:$0xf]
      %v293 = vld [vmem:[%s1 + $0x8] sm:$0xf]
      %v294 = vld [vmem:[%s1 + $0xc] sm:$0xf]
      %v295 = vld [vmem:[%s1 + $0x10] sm:$0xf]
      %v296 = vld [vmem:[%s1 + $0x14] sm:$0xf]
      %v297 = vld [vmem:[%s1 + $0x18] sm:$0xf]
      %v298 = vld [vmem:[%s1 + $0x1c] sm:$0xf]
      %v299 = vld [vmem:[%s1 + $0x20] sm:$0xf]
      %v300 = vld [vmem:[%s1 + $0x24] sm:$0xf]
      %v301 = vld [vmem:[%s1 + $0x28] sm:$0xf]
      %v302 = vld [vmem:[%s1 + $0x2c] sm:$0xf]
      %v303 = vld [vmem:[%s1 + $0x30] sm:$0xf]
      %v304 = vld [vmem:[%s1 + $0x34] sm:$0xf]
      %v305 = vld [vmem:[%s1 + $0x38] sm:$0xf]
      %v306 = vld [vmem:[%s1 + $0x3c] sm:$0xf]
      %v307 = vld [vmem:[%s2] sm:$0x1]
      %v309 = vlaneseq
      %v310 = vshrl.u32 %v309, 7
      %v311 = vsub.s32 0, %v310
      %v312 = vrot.slane %v307, %v311
      %v322 = vunpack.c.l.b16 %v283
      %v323 = vunpack.c.l.b16 %v284
      %v324 = vunpack.c.l.b16 %v285
      %v325 = vunpack.c.l.b16 %v286
      %v326 = vunpack.c.l.b16 %v287
      %v327 = vunpack.c.l.b16 %v288
      %v328 = vunpack.c.l.b16 %v289
      %v329 = vunpack.c.l.b16 %v290
      %v330 = vpack.c.b16 %v323, %v322
      %v331 = vpack.c.b16 %v325, %v324
      %v332 = vpack.c.b16 %v327, %v326
      %v333 = vpack.c.b16 %v329, %v328
      %v354 = vunpack.c.l.b16 %v291
      %v355 = vunpack.c.l.b16 %v292
      %v356 = vunpack.c.l.b16 %v293
      %v357 = vunpack.c.l.b16 %v294
      %v358 = vunpack.c.l.b16 %v295
      %v359 = vunpack.c.l.b16 %v296
      %v360 = vunpack.c.l.b16 %v297
      %v361 = vunpack.c.l.b16 %v298
      %v362 = vunpack.c.l.b16 %v299
      %v363 = vunpack.c.l.b16 %v300
      %v364 = vunpack.c.l.b16 %v301
      %v365 = vunpack.c.l.b16 %v302
      %v366 = vunpack.c.l.b16 %v303
      %v367 = vunpack.c.l.b16 %v304
      %v368 = vunpack.c.l.b16 %v305
      %v369 = vunpack.c.l.b16 %v306
      %v370 = vpack.c.b16 %v355, %v354
      %v371 = vpack.c.b16 %v357, %v356
      %v372 = vpack.c.b16 %v359, %v358
      %v373 = vpack.c.b16 %v361, %v360
      %v374 = vpack.c.b16 %v363, %v362
      %v375 = vpack.c.b16 %v365, %v364
      %v376 = vpack.c.b16 %v367, %v366
      %v377 = vpack.c.b16 %v369, %v368
      %386 = vmatprep.subr.bf16.mxu0 0
      %387 = vmatpush1.bf16.msra.mxu0 %v370
      %388 = vmatprep.subr.bf16.mxu0 0
      %389 = vmatpush1.bf16.msra.mxu0 %v371
      %390 = vmatprep.subr.bf16.mxu0 0
      %391 = vmatpush1.bf16.msra.mxu0 %v372
      %392 = vmatprep.subr.bf16.mxu0 0
      %393 = vmatpush1.bf16.msra.mxu0 %v373
      %394 = vmatprep.subr.bf16.mxu0 0
      %395 = vmatpush1.bf16.msra.mxu0 %v374
      %396 = vmatprep.subr.bf16.mxu0 0
      %397 = vmatpush1.bf16.msra.mxu0 %v375
      %398 = vmatprep.subr.bf16.mxu0 0
      %399 = vmatpush1.bf16.msra.mxu0 %v376
      %400 = vmatprep.subr.bf16.mxu0 0
      %401 = vmatpush1.bf16.msra.mxu0 %v377
      %402 = vmatprep.subr.bf16.mxu0 0
      %403 = vmatpush1.bf16.msra.mxu0 0
      %404 = vmatprep.subr.bf16.mxu0 0
      %405 = vmatpush1.bf16.msra.mxu0 0
      %406 = vmatprep.subr.bf16.mxu0 0
      %407 = vmatpush1.bf16.msra.mxu0 0
      %408 = vmatprep.subr.bf16.mxu0 0
      %409 = vmatpush1.bf16.msra.mxu0 0
      %410 = vmatprep.subr.bf16.mxu0 0
      %411 = vmatpush1.bf16.msra.mxu0 0
      %412 = vmatprep.subr.bf16.mxu0 0
      %413 = vmatpush1.bf16.msra.mxu0 0
      %414 = vmatprep.subr.bf16.mxu0 0
      %415 = vmatpush1.bf16.msra.mxu0 0
      %416 = vmatprep.subr.bf16.mxu0 0
      %417 = vmatpush1.bf16.msra.mxu0 0
      %418 = vmatprep.mubr.bf16.mxu0 0
      %419 = vmatmul.mubr.bf16.gmra.mrb[0].mxu0 %v330
      %v420 = vpop.f32.mrb[0].mxu0
      %v421 = vadd.f32 %v312, %v420
      %v422 = vpop.f32.mrb[0].mxu0
      %v423 = vpop.f32.mrb[0].mxu0
      %v424 = vadd.f32 %v312, %v423
      %v425 = vpop.f32.mrb[0].mxu0
      %426 = vmatprep.mubr.bf16.mxu0 0
      %427 = vmatmul.mubr.bf16.gmra.mrb[0].mxu0 %v331
      %v428 = vpop.f32.mrb[0].mxu0
      %v429 = vadd.f32 %v312, %v428
      %v430 = vpop.f32.mrb[0].mxu0
      %v431 = vpop.f32.mrb[0].mxu0
      %v432 = vadd.f32 %v312, %v431
      %v433 = vpop.f32.mrb[0].mxu0
      %434 = vmatprep.mubr.bf16.mxu0 0
      %435 = vmatmul.mubr.bf16.gmra.mrb[0].mxu0 %v332
      %v436 = vpop.f32.mrb[0].mxu0
      %v437 = vadd.f32 %v312, %v436
      %v438 = vpop.f32.mrb[0].mxu0
      %v439 = vpop.f32.mrb[0].mxu0
      %v440 = vadd.f32 %v312, %v439
      %v441 = vpop.f32.mrb[0].mxu0
      %442 = vmatprep.mubr.bf16.mxu0 0
      %443 = vmatmul.mubr.bf16.gmra.mrb[0].mxu0 %v333
      %v444 = vpop.f32.mrb[0].mxu0
      %v445 = vadd.f32 %v312, %v444
      %v446 = vpop.f32.mrb[0].mxu0
      %v447 = vpop.f32.mrb[0].mxu0
      %v448 = vadd.f32 %v312, %v447
      %v449 = vpop.f32.mrb[0].mxu0
      %450 = vdwg.mxu0
      %v451 = vmax.f32 %v421, 0.0
      %v452 = vmax.f32 %v424, 0.0
      %v453 = vmax.f32 %v429, 0.0
      %v454 = vmax.f32 %v432, 0.0
      %v455 = vmax.f32 %v437, 0.0
      %v456 = vmax.f32 %v440, 0.0
      %v457 = vmax.f32 %v445, 0.0
      %v458 = vmax.f32 %v448, 0.0
      %v459 = vpack.c.bf16 %v452, %v451
      %v460 = vpack.c.bf16 %v454, %v453
      %v461 = vpack.c.bf16 %v456, %v455
      %v462 = vpack.c.bf16 %v458, %v457
      %v463 = vld [vmem:[%s3] sm:$0xf]
      %v464 = vld [vmem:[%s3 + $0x4] sm:$0xf]
      %v465 = vld [vmem:[%s3 + $0x8] sm:$0xf]
      %v466 = vld [vmem:[%s3 + $0xc] sm:$0xf]
      %v467 = vld [vmem:[%s3 + $0x10] sm:$0xf]
      %v468 = vld [vmem:[%s3 + $0x14] sm:$0xf]
      %v469 = vld [vmem:[%s3 + $0x18] sm:$0xf]
      %v470 = vld [vmem:[%s3 + $0x1c] sm:$0xf]
      %v471 = vld [vmem:[%s3 + $0x20] sm:$0xf]
      %v472 = vld [vmem:[%s3 + $0x24] sm:$0xf]
      %v473 = vld [vmem:[%s3 + $0x28] sm:$0xf]
      %v474 = vld [vmem:[%s3 + $0x2c] sm:$0xf]
      %v475 = vld [vmem:[%s3 + $0x30] sm:$0xf]
      %v476 = vld [vmem:[%s3 + $0x34] sm:$0xf]
      %v477 = vld [vmem:[%s3 + $0x38] sm:$0xf]
      %v478 = vld [vmem:[%s3 + $0x3c] sm:$0xf]
      %v479 = vld [vmem:[%s4] sm:$0x1]
      %v481 = vlaneseq
      %v482 = vshrl.u32 %v481, 7
      %v483 = vsub.s32 0, %v482
      %v484 = vrot.slane %v479, %v483
      %v502 = vunpack.c.l.b16 %v463
      %v503 = vunpack.c.l.b16 %v464
      %v504 = vunpack.c.l.b16 %v465
      %v505 = vunpack.c.l.b16 %v466
      %v506 = vunpack.c.l.b16 %v467
      %v507 = vunpack.c.l.b16 %v468
      %v508 = vunpack.c.l.b16 %v469
      %v509 = vunpack.c.l.b16 %v470
      %v510 = vunpack.c.l.b16 %v471
      %v511 = vunpack.c.l.b16 %v472
      %v512 = vunpack.c.l.b16 %v473
      %v513 = vunpack.c.l.b16 %v474
      %v514 = vunpack.c.l.b16 %v475
      %v515 = vunpack.c.l.b16 %v476
      %v516 = vunpack.c.l.b16 %v477
      %v517 = vunpack.c.l.b16 %v478
      %v518 = vpack.c.b16 %v503, %v502
      %v519 = vpack.c.b16 %v505, %v504
      %v520 = vpack.c.b16 %v507, %v506
      %v521 = vpack.c.b16 %v509, %v508
      %v522 = vpack.c.b16 %v511, %v510
      %v523 = vpack.c.b16 %v513, %v512
      %v524 = vpack.c.b16 %v515, %v514
      %v525 = vpack.c.b16 %v517, %v516
      %534 = vmatprep.subr.bf16.mxu0 0
      %535 = vmatpush1.bf16.msra.mxu0 %v518
      %536 = vmatprep.subr.bf16.mxu0 0
      %537 = vmatpush1.bf16.msra.mxu0 %v519
      %538 = vmatprep.subr.bf16.mxu0 0
      %539 = vmatpush1.bf16.msra.mxu0 %v520
      %540 = vmatprep.subr.bf16.mxu0 0
      %541 = vmatpush1.bf16.msra.mxu0 %v521
      %542 = vmatprep.subr.bf16.mxu0 0
      %543 = vmatpush1.bf16.msra.mxu0 %v522
      %544 = vmatprep.subr.bf16.mxu0 0
      %545 = vmatpush1.bf16.msra.mxu0 %v523
      %546 = vmatprep.subr.bf16.mxu0 0
      %547 = vmatpush1.bf16.msra.mxu0 %v524
      %548 = vmatprep.subr.bf16.mxu0 0
      %549 = vmatpush1.bf16.msra.mxu0 %v525
      %550 = vmatprep.subr.bf16.mxu0 0
      %551 = vmatpush1.bf16.msra.mxu0 0
      %552 = vmatprep.subr.bf16.mxu0 0
      %553 = vmatpush1.bf16.msra.mxu0 0
      %554 = vmatprep.subr.bf16.mxu0 0
      %555 = vmatpush1.bf16.msra.mxu0 0
      %556 = vmatprep.subr.bf16.mxu0 0
      %557 = vmatpush1.bf16.msra.mxu0 0
      %558 = vmatprep.subr.bf16.mxu0 0
      %559 = vmatpush1.bf16.msra.mxu0 0
      %560 = vmatprep.subr.bf16.mxu0 0
      %561 = vmatpush1.bf16.msra.mxu0 0
      %562 = vmatprep.subr.bf16.mxu0 0
      %563 = vmatpush1.bf16.msra.mxu0 0
      %564 = vmatprep.subr.bf16.mxu0 0
      %565 = vmatpush1.bf16.msra.mxu0 0
      %566 = vmatprep.mubr.bf16.mxu0 0
      %567 = vmatmul.mubr.bf16.gmra.mrb[0].mxu0 %v459
      %v568 = vpop.f32.mrb[0].mxu0
      %v569 = vadd.f32 %v484, %v568
      %v570 = vpop.f32.mrb[0].mxu0
      %v571 = vpop.f32.mrb[0].mxu0
      %v572 = vadd.f32 %v484, %v571
      %v573 = vpop.f32.mrb[0].mxu0
      %574 = vmatprep.mubr.bf16.mxu0 0
      %575 = vmatmul.mubr.bf16.gmra.mrb[0].mxu0 %v460
      %v576 = vpop.f32.mrb[0].mxu0
      %v577 = vadd.f32 %v484, %v576
      %v578 = vpop.f32.mrb[0].mxu0
      %v579 = vpop.f32.mrb[0].mxu0
      %v580 = vadd.f32 %v484, %v579
      %v581 = vpop.f32.mrb[0].mxu0
      %582 = vmatprep.mubr.bf16.mxu0 0
      %583 = vmatmul.mubr.bf16.gmra.mrb[0].mxu0 %v461
      %v584 = vpop.f32.mrb[0].mxu0
      %v585 = vadd.f32 %v484, %v584
      %v586 = vpop.f32.mrb[0].mxu0
      %v587 = vpop.f32.mrb[0].mxu0
      %v588 = vadd.f32 %v484, %v587
      %v589 = vpop.f32.mrb[0].mxu0
      %590 = vmatprep.mubr.bf16.mxu0 0
      %591 = vmatmul.mubr.bf16.gmra.mrb[0].mxu0 %v462
      %v592 = vpop.f32.mrb[0].mxu0
      %v593 = vadd.f32 %v484, %v592
      %v594 = vpop.f32.mrb[0].mxu0
      %v595 = vpop.f32.mrb[0].mxu0
      %v596 = vadd.f32 %v484, %v595
      %v597 = vpop.f32.mrb[0].mxu0
      %598 = vdwg.mxu0
      %v599 = vmax.f32 %v569, 0.0
      %v600 = vmax.f32 %v572, 0.0
      %v601 = vmax.f32 %v577, 0.0
      %v602 = vmax.f32 %v580, 0.0
      %v603 = vmax.f32 %v585, 0.0
      %v604 = vmax.f32 %v588, 0.0
      %v605 = vmax.f32 %v593, 0.0
      %v606 = vmax.f32 %v596, 0.0
      %v607 = vpack.c.bf16 %v600, %v599
      %v608 = vpack.c.bf16 %v602, %v601
      %v609 = vpack.c.bf16 %v604, %v603
      %v610 = vpack.c.bf16 %v606, %v605
      %v611 = vld [vmem:[%s5] sm:$0xf]
      %v612 = vld [vmem:[%s5 + $0x4] sm:$0xf]
      %v613 = vld [vmem:[%s5 + $0x8] sm:$0xf]
      %v614 = vld [vmem:[%s5 + $0xc] sm:$0xf]
      %v615 = vld [vmem:[%s5 + $0x10] sm:$0xf]
      %v616 = vld [vmem:[%s5 + $0x14] sm:$0xf]
      %v617 = vld [vmem:[%s5 + $0x18] sm:$0xf]
      %v618 = vld [vmem:[%s5 + $0x1c] sm:$0xf]
      %v619 = vld [vmem:[%s5 + $0x20] sm:$0xf]
      %v620 = vld [vmem:[%s5 + $0x24] sm:$0xf]
      %v621 = vld [vmem:[%s5 + $0x28] sm:$0xf]
      %v622 = vld [vmem:[%s5 + $0x2c] sm:$0xf]
      %v623 = vld [vmem:[%s5 + $0x30] sm:$0xf]
      %v624 = vld [vmem:[%s5 + $0x34] sm:$0xf]
      %v625 = vld [vmem:[%s5 + $0x38] sm:$0xf]
      %v626 = vld [vmem:[%s5 + $0x3c] sm:$0xf]
      %v627 = vld [vmem:[%s6] sm:$0x1]
      %v629 = vlaneseq
      %v630 = vshrl.u32 %v629, 7
      %v631 = vsub.s32 0, %v630
      %v632 = vrot.slane %v627, %v631
      %v650 = vunpack.c.l.b16 %v611
      %v651 = vunpack.c.l.b16 %v612
      %v652 = vunpack.c.l.b16 %v613
      %v653 = vunpack.c.l.b16 %v614
      %v654 = vunpack.c.l.b16 %v615
      %v655 = vunpack.c.l.b16 %v616
      %v656 = vunpack.c.l.b16 %v617
      %v657 = vunpack.c.l.b16 %v618
      %v658 = vunpack.c.l.b16 %v619
      %v659 = vunpack.c.l.b16 %v620
      %v660 = vunpack.c.l.b16 %v621
      %v661 = vunpack.c.l.b16 %v622
      %v662 = vunpack.c.l.b16 %v623
      %v663 = vunpack.c.l.b16 %v624
      %v664 = vunpack.c.l.b16 %v625
      %v665 = vunpack.c.l.b16 %v626
      %v666 = vpack.c.b16 %v651, %v650
      %v667 = vpack.c.b16 %v653, %v652
      %v668 = vpack.c.b16 %v655, %v654
      %v669 = vpack.c.b16 %v657, %v656
      %v670 = vpack.c.b16 %v659, %v658
      %v671 = vpack.c.b16 %v661, %v660
      %v672 = vpack.c.b16 %v663, %v662
      %v673 = vpack.c.b16 %v665, %v664
      %682 = vmatprep.subr.bf16.mxu0 0
      %683 = vmatpush1.bf16.msra.mxu0 %v666
      %684 = vmatprep.subr.bf16.mxu0 0
      %685 = vmatpush1.bf16.msra.mxu0 %v667
      %686 = vmatprep.subr.bf16.mxu0 0
      %687 = vmatpush1.bf16.msra.mxu0 %v668
      %688 = vmatprep.subr.bf16.mxu0 0
      %689 = vmatpush1.bf16.msra.mxu0 %v669
      %690 = vmatprep.subr.bf16.mxu0 0
      %691 = vmatpush1.bf16.msra.mxu0 %v670
      %692 = vmatprep.subr.bf16.mxu0 0
      %693 = vmatpush1.bf16.msra.mxu0 %v671
      %694 = vmatprep.subr.bf16.mxu0 0
      %695 = vmatpush1.bf16.msra.mxu0 %v672
      %696 = vmatprep.subr.bf16.mxu0 0
      %697 = vmatpush1.bf16.msra.mxu0 %v673
      %698 = vmatprep.subr.bf16.mxu0 0
      %699 = vmatpush1.bf16.msra.mxu0 0
      %700 = vmatprep.subr.bf16.mxu0 0
      %701 = vmatpush1.bf16.msra.mxu0 0
      %702 = vmatprep.subr.bf16.mxu0 0
      %703 = vmatpush1.bf16.msra.mxu0 0
      %704 = vmatprep.subr.bf16.mxu0 0
      %705 = vmatpush1.bf16.msra.mxu0 0
      %706 = vmatprep.subr.bf16.mxu0 0
      %707 = vmatpush1.bf16.msra.mxu0 0
      %708 = vmatprep.subr.bf16.mxu0 0
      %709 = vmatpush1.bf16.msra.mxu0 0
      %710 = vmatprep.subr.bf16.mxu0 0
      %711 = vmatpush1.bf16.msra.mxu0 0
      %712 = vmatprep.subr.bf16.mxu0 0
      %713 = vmatpush1.bf16.msra.mxu0 0
      %714 = vmatprep.mubr.bf16.mxu0 0
      %715 = vmatmul.mubr.bf16.gmra.mrb[0].mxu0 %v607
      %v716 = vpop.f32.mrb[0].mxu0
      %v717 = vadd.f32 %v632, %v716
      %v718 = vpop.f32.mrb[0].mxu0
      %v719 = vpop.f32.mrb[0].mxu0
      %v720 = vadd.f32 %v632, %v719
      %v721 = vpop.f32.mrb[0].mxu0
      %722 = vmatprep.mubr.bf16.mxu0 0
      %723 = vmatmul.mubr.bf16.gmra.mrb[0].mxu0 %v608
      %v724 = vpop.f32.mrb[0].mxu0
      %v725 = vadd.f32 %v632, %v724
      %v726 = vpop.f32.mrb[0].mxu0
      %v727 = vpop.f32.mrb[0].mxu0
      %v728 = vadd.f32 %v632, %v727
      %v729 = vpop.f32.mrb[0].mxu0
      %730 = vmatprep.mubr.bf16.mxu0 0
      %731 = vmatmul.mubr.bf16.gmra.mrb[0].mxu0 %v609
      %v732 = vpop.f32.mrb[0].mxu0
      %v733 = vadd.f32 %v632, %v732
      %v734 = vpop.f32.mrb[0].mxu0
      %v735 = vpop.f32.mrb[0].mxu0
      %v736 = vadd.f32 %v632, %v735
      %v737 = vpop.f32.mrb[0].mxu0
      %738 = vmatprep.mubr.bf16.mxu0 0
      %739 = vmatmul.mubr.bf16.gmra.mrb[0].mxu0 %v610
      %v740 = vpop.f32.mrb[0].mxu0
      %v741 = vadd.f32 %v632, %v740
      %v742 = vpop.f32.mrb[0].mxu0
      %v743 = vpop.f32.mrb[0].mxu0
      %v744 = vadd.f32 %v632, %v743
      %v745 = vpop.f32.mrb[0].mxu0
      %746 = vdwg.mxu0
      %747 = vst [vmem:[%s280] sm:$0xff] %v717
      %748 = vst [vmem:[%s280 + $0x8] sm:$0xff] %v720
      %749 = vst [vmem:[%s280 + $0x10] sm:$0xff] %v725
      %750 = vst [vmem:[%s280 + $0x18] sm:$0xff] %v728
      %751 = vst [vmem:[%s280 + $0x20] sm:$0xff] %v733
      %752 = vst [vmem:[%s280 + $0x28] sm:$0xff] %v736
      %753 = vst [vmem:[%s280 + $0x30] sm:$0xff] %v741
      %754 = vst [vmem:[%s280 + $0x38] sm:$0xff] %v744
      %s755 = smul.u32 8, %s18
      %p756 = scmp.lt.s32.totalorder %s755, 31
      %s757 = scalar_select %p756, %s755, 31
      %s758 = smul.addr %s757, 8
      %s759 = scalar_lea.vmem %s7, %s758
      // Predicated region
      $region49: #{mlp_forward.1} parent=47 // pred_check
        %p760 = pneg %p188
      $region50: #{mlp_forward.1} parent=47 // pred_check_branch
        %762 = sbr.rel (%p760) target = $region52
      $region51: #{mlp_forward.1} parent=47 // pred_region
        %s763 = smul.u32 8, %s18
      $region52: #{mlp_forward.1} parent=47 // pred_fallthru
        _
    $region48: #{mlp_forward.1} parent=5 // pred_fallthru
      _
    %p764 = scmp.le.s32.totalorder 2, %s13
    // Predicated region
    $region53: #{mlp_forward.1} parent=5 // pred_check
      %p765 = pneg %p764
    $region54: #{mlp_forward.1} parent=5 // pred_check_branch
      %767 = sbr.rel (%p765) target = $region56
    $region55: #{mlp_forward.1} parent=5 // pred_region
      %s768 = ssub.s32 %s13, 2
      // Predicated region
      $region57: #{mlp_forward.1} parent=55 // pred_check
        %p769 = pneg %p194
      $region58: #{mlp_forward.1} parent=55 // pred_check_branch
        %771 = sbr.rel (%p769) target = $region60
      $region59: #{mlp_forward.1} parent=55 // pred_region
        %s772 = smul.u32 8, %s19
        %p773 = scmp.lt.s32.totalorder %s772, 31
        %s774 = scalar_select %p773, %s772, 31
        %s775 = smul.addr %s774, 8
        %s776 = scalar_lea.vmem %s7, %s775
      $region60: #{mlp_forward.1} parent=55 // pred_fallthru
        _
    $region56: #{mlp_forward.1} parent=5 // pred_fallthru
      _
  $region6: #{mlp_forward.1} parent=0 // loop_footer
    %s17 = sadd.s32 1, %s13
  $region7: #{mlp_forward.1} parent=0 // loop_footer_branch
    %12 = sbr.rel target = $region3
  $region8: #{mlp_forward.1} parent=0 // loop_exit
    _

</llo_original>
